<compile_context>
chip_gen: v5e
topology: v5e:2x2
jax: 0.10.0
libtpu: 0.0.40
codegen_flags: <defaults>
</compile_context>

<pallas_src>
import functools

import jax
import jax.numpy as jnp
from jax.experimental import pallas as pl
from jax.experimental.pallas import tpu as pltpu


def _sublane_pack(dtype) -> int:
    """Rows-per-sublane packing for a dtype (8 for f32, 16 for bf16, 32 for int8)."""
    size = jnp.dtype(dtype).itemsize
    if size >= 4:
        return 8
    if size == 2:
        return 16
    return 32


def _round_up(x, m):
    return ((x + m - 1) // m) * m


def _rmsnorm_kernel(x_ref, w_ref, o_ref, *, eps, inv_dim):
    # x_ref: (tile_rows, dim_p), w_ref: (1, dim_p), o_ref: (tile_rows, dim_p)
    x = x_ref[...]
    # PyTorch does the norm in float32 ("float(x)") then casts back to the
    # input dtype before the weight multiply.  Upcast in-register only — the
    # VMEM tiles stay in the native (possibly bf16) dtype.
    xf = x.astype(jnp.float32)
    # Mean over the *true* feature dim (inv_dim = 1/dim); padded lanes are
    # zero and do not contribute to the sum.
    ms = jnp.sum(xf * xf, axis=-1, keepdims=True) * inv_dim
    normed = (xf * jax.lax.rsqrt(ms + eps)).astype(x.dtype)
    o_ref[...] = (normed * w_ref[...]).astype(o_ref.dtype)


def rmsnorm(x, weights, eps=1e-5, tile_rows=None, out_dtype=None):
    """RMSNorm over the last axis.  x: (..., dim), weights: (dim,)."""
    orig_shape = x.shape
    dim = orig_shape[-1]
    rows = 1
    for s in orig_shape[:-1]:
        rows *= s

    # Llama-style: output in the activation dtype (avoids doubling the HBM
    # writeback when x is bf16 and weights are f32).  Override via out_dtype.
    out_dtype = jnp.dtype(x.dtype if out_dtype is None else out_dtype)

    x2 = x.reshape(rows, dim)
    w2 = weights.reshape(1, dim)

    # Pad the lane axis to a multiple of 128 -> unmasked, lane-dense stores.
    dim_p = _round_up(dim, 128)
    if dim_p != dim:
        x2 = jnp.pad(x2, ((0, 0), (0, dim_p - dim)))
        w2 = jnp.pad(w2, ((0, 0), (0, dim_p - dim)))

    # Dtype-aware sublane packing: tile_rows must be a multiple of this so
    # vregs are fully occupied for sub-32-bit activations.
    pack = max(_sublane_pack(x2.dtype), _sublane_pack(out_dtype))

    if tile_rows is None:
        # Size the row tile against a conservative VMEM budget so the choice
        # is safe on every generation (v5e/v6e: 128 MiB physical VMEM,
        # v7x: 64 MiB).  Double-buffered input + output tiles kept <= ~16 MiB.
        tile_budget = 16 * (1 << 20)
        bytes_per_row = dim_p * (jnp.dtype(x2.dtype).itemsize + out_dtype.itemsize)
        by_vmem = max(pack, tile_budget // (2 * bytes_per_row))
        tile_rows = min(512, by_vmem)
    tile_rows = max(pack, _round_up(int(tile_rows), pack))
    tile_rows = min(tile_rows, _round_up(rows, pack))

    # Ragged tail: pad rows instead of forcing callers back to tiny tiles.
    rows_p = _round_up(rows, tile_rows)
    if rows_p != rows:
        x2 = jnp.pad(x2, ((0, rows_p - rows), (0, 0)))

    grid = (rows_p // tile_rows,)

    # Explicit VMEM limit sized to the tiles (double-buffered in/out, f32
    # temporaries, resident weight) plus headroom, clamped to stay well inside
    # the smallest physical VMEM (v7x: 64 MiB per TensorCore).
    in_bytes = tile_rows * dim_p * jnp.dtype(x2.dtype).itemsize
    out_bytes = tile_rows * dim_p * out_dtype.itemsize
    f32_tmp = tile_rows * dim_p * 4
    w_bytes = dim_p * jnp.dtype(w2.dtype).itemsize
    vmem_limit = 2 * (in_bytes + out_bytes) + 2 * f32_tmp + 2 * w_bytes + (2 << 20)
    vmem_limit = int(min(48 << 20, max(32 << 20, vmem_limit)))

    kernel = functools.partial(_rmsnorm_kernel, eps=float(eps), inv_dim=1.0 / dim)

    out = pl.pallas_call(
        kernel,
        out_shape=jax.ShapeDtypeStruct((rows_p, dim_p), out_dtype),
        grid_spec=pltpu.PrefetchScalarGridSpec(
            num_scalar_prefetch=0,
            grid=grid,
            in_specs=[
                pl.BlockSpec((tile_rows, dim_p), lambda i: (i, 0)),
                # Constant index_map -> weight block stays resident in VMEM
                # (not re-DMA'd every grid step).
                pl.BlockSpec((1, dim_p), lambda i: (0, 0)),
            ],
            out_specs=pl.BlockSpec((tile_rows, dim_p), lambda i: (i, 0)),
        ),
        compiler_params=pltpu.CompilerParams(
            dimension_semantics=("parallel",),   # rows shard across TCs on v7x
            vmem_limit_bytes=vmem_limit,
        ),
    )(x2, w2)

    out = out[:rows, :dim]
    return out.reshape(orig_shape)


if __name__ == "__main__":
    key = jax.random.PRNGKey(0)
    batch, seq, hidden = 2, 8, 32
    eps = 1e-5

    x = jax.random.normal(key, (batch, seq, hidden), dtype=jnp.float32)
    # Deterministic parameter init, same as nn.Parameter(torch.ones(dim))
    weights = jnp.ones((hidden,), dtype=jnp.float32)

    out = rmsnorm(x, weights, eps=eps)
    out = jax.block_until_ready(out)

    # Reference check (plain JAX, same semantics as the PyTorch module)
    xf = x.astype(jnp.float32)
    ref = xf * jax.lax.rsqrt(jnp.mean(xf * xf, axis=-1, keepdims=True) + eps)
    ref = ref.astype(x.dtype) * weights

    assert out.shape == x.shape
    assert out.dtype == x.dtype
    assert jnp.allclose(out, ref.astype(out.dtype), atol=1e-5, rtol=1e-5), \
        "mismatch vs reference"

    print("KERNEL_OK")
</pallas_src>

<mosaic_0001>
module attributes {stable_mosaic.version = 11 : i64} {
  func.func @_rmsnorm_kernel(%arg0: i32, %arg1: memref<16x128xf32, #tpu.memory_space<vmem>>, %arg2: memref<1x128xf32, #tpu.memory_space<vmem>>, %arg3: memref<16x128xf32, #tpu.memory_space<vmem>>) attributes {dimension_semantics = [#tpu.dimension_semantics<parallel>], iteration_bounds = array<i64: 1>, scalar_prefetch = 0 : i64, scratch_operands = 0 : i64, tpu.core_type = #tpu.core_type<tc>, window_params = [{transform_indices = @transform_0, window_bounds = array<i64: 16, 128>}, {pipeline_mode = #tpu.pipeline_mode<synchronous>, transform_indices = @transform_1, window_bounds = array<i64: 1, 128>}, {transform_indices = @transform_2, window_bounds = array<i64: 16, 128>}]} {
    %c0 = arith.constant 0 : index
    %c0_0 = arith.constant 0 : index
    %0 = vector.load %arg1[%c0, %c0_0] : memref<16x128xf32, #tpu.memory_space<vmem>>, vector<16x128xf32>
    %1 = arith.mulf %0, %0 : vector<16x128xf32>
    %cst = arith.constant dense<0.000000e+00> : vector<16xf32>
    %2 = vector.multi_reduction <add>, %1, %cst [1] : vector<16x128xf32> to vector<16xf32>
    %3 = vector.shape_cast %2 : vector<16xf32> to vector<16x1xf32>
    %cst_1 = arith.constant 3.125000e-02 : f32
    %4 = vector.broadcast %cst_1 : f32 to vector<16x1xf32>
    %5 = arith.mulf %3, %4 : vector<16x1xf32>
    %cst_2 = arith.constant 9.99999974E-6 : f32
    %6 = vector.broadcast %cst_2 : f32 to vector<16x1xf32>
    %7 = arith.addf %5, %6 : vector<16x1xf32>
    %8 = math.rsqrt %7 : vector<16x1xf32>
    %9 = vector.broadcast %8 : vector<16x1xf32> to vector<16x128xf32>
    %10 = arith.mulf %0, %9 : vector<16x128xf32>
    %c0_3 = arith.constant 0 : index
    %c0_4 = arith.constant 0 : index
    %11 = vector.load %arg2[%c0_3, %c0_4] : memref<1x128xf32, #tpu.memory_space<vmem>>, vector<1x128xf32>
    %12 = vector.broadcast %11 : vector<1x128xf32> to vector<16x128xf32>
    %13 = arith.mulf %10, %12 : vector<16x128xf32>
    %c0_5 = arith.constant 0 : index
    %c0_6 = arith.constant 0 : index
    %14 = vector.load %arg3[%c0_5, %c0_6] : memref<16x128xf32, #tpu.memory_space<vmem>>, vector<16x128xf32>
    tpu.vector_store %arg3[%c0_5, %c0_6], %13 {strides = array<i32>} : memref<16x128xf32, #tpu.memory_space<vmem>>, vector<16x128xf32>,
    return
  }
  func.func @transform_0(%arg0: i32) -> (i32, i32) {
    %c0_i32 = arith.constant 0 : i32
    %c0_i32_0 = arith.constant 0 : i32
    return %arg0, %c0_i32 : i32, i32
  }
  func.func @transform_1(%arg0: i32) -> (i32, i32) {
    %c0_i32 = arith.constant 0 : i32
    %c0_i32_0 = arith.constant 0 : i32
    %c0_i32_1 = arith.constant 0 : i32
    return %c0_i32, %c0_i32_0 : i32, i32
  }
  func.func @transform_2(%arg0: i32) -> (i32, i32) {
    %c0_i32 = arith.constant 0 : i32
    %c0_i32_0 = arith.constant 0 : i32
    return %arg0, %c0_i32 : i32, i32
  }
}

</mosaic_0001>

<llo_original>
// kernel: tpu_custom_call.1
$region0: #{tpu_custom_call.1}
  #allocation0 [shape = 'u32[]', space=smem, size = 0x4, offset = 0x4, fixed_abs, tag = 'smem constant byte address 0x4 - core index']
  #allocation1 [shape = 'u32[72,128]{1,0:T(1,128)}', space=vmem, size = 0x9000, scoped, tag = 'internal scratch']
  %s0 = inlined_call_operand.hbm [shape: f32[16,128], index: 0, kind: input, shape index: {}]
  %s1 = inlined_call_operand.hbm [shape: f32[1,128], index: 1, kind: input, shape index: {}]
  %s2 = inlined_call_operand.hbm [shape: f32[16,128], index: 2, kind: output, shape index: {}]
  %s3 = sld [smem:[#allocation0]]
  $region26: #{tpu_custom_call.1} parent=0
    _
  %s5 = ssub.s32 1, %s3
  %s6 = scalar_select 0, %s5, %s3
  $region1: #{tpu_custom_call.1} parent=0
    #allocation2 [shape = 'u8[8192]{0}', space=vmem, size = 0x2000, scoped, tag = 'input window, operand 0, single buffered']
    #allocation3 [shape = 's32[1]{0}', space=sflag, size = 0x4, scoped, tag = 'scoped memory for tpu_custom_call.1']
    #allocation4 [shape = 's32[1]{0}', space=sflag, size = 0x4, scoped, tag = 'scoped memory for tpu_custom_call.1']
    #allocation5 [shape = 'u8[512]{0}', space=vmem, size = 0x400, scoped, tag = 'input window, operand 1, single buffered']
    #allocation6 [shape = 's32[1]{0}', space=sflag, size = 0x4, scoped, tag = 'scoped memory for tpu_custom_call.1']
    #allocation7 [shape = 'u8[8192]{0}', space=vmem, size = 0x2000, scoped, tag = 'output window, operand 0, single buffered']
    %7 = vsyncpa [#allocation3], 0
    %8 = vsyncpa [#allocation6], 0
    %9 = vsyncpa [#allocation4], 0
    // Predicated region
    $region2: #{tpu_custom_call.1} parent=1 // pred_check
      _
    $region3: #{tpu_custom_call.1} parent=1 // pred_check_branch
      %11 = sbr.rel (0) target = $region5
    $region4: #{tpu_custom_call.1} parent=1 // pred_region
      %13 = vsyncadd [#allocation3], 0
      %s14 = sshll.u32 %s0, 4
      %s15 = int_to_ptr.hbm [resolvable:$true] %s14
      %s16 = sshll.u32 [#allocation2], 4
      %s17 = int_to_ptr.vmem [resolvable:$true] %s16
      %22 = dma.hbm_to_vmem [thread:$0]  %s15, 256, %s17, [#allocation3], 128, 128, 8
    $region5: #{tpu_custom_call.1} parent=1 // pred_fallthru
      _
    // Predicated region
    $region6: #{tpu_custom_call.1} parent=1 // pred_check
      _
    $region7: #{tpu_custom_call.1} parent=1 // pred_check_branch
      %24 = sbr.rel (0) target = $region9
    $region8: #{tpu_custom_call.1} parent=1 // pred_region
      %26 = vsyncadd [#allocation6], 0
      %s28 = sshll.u32 %s1, 4
      %s29 = int_to_ptr.hbm [resolvable:$true] %s28
      %s30 = sshll.u32 [#allocation5], 4
      %s31 = int_to_ptr.vmem [resolvable:$true] %s30
      %33 = dma.hbm_to_vmem [thread:$0]  %s29, 16, %s31, [#allocation6]
    $region9: #{tpu_custom_call.1} parent=1 // pred_fallthru
      _
    // Predicated region
    $region10: #{tpu_custom_call.1} parent=1 // pred_check
      _
    $region11: #{tpu_custom_call.1} parent=1 // pred_check_branch
      %35 = sbr.rel (0) target = $region13
    $region12: #{tpu_custom_call.1} parent=1 // pred_region
      %37 = dma.done [#allocation3], 256
    $region13: #{tpu_custom_call.1} parent=1 // pred_fallthru
      _
    // Predicated region
    $region14: #{tpu_custom_call.1} parent=1 // pred_check
      _
    $region15: #{tpu_custom_call.1} parent=1 // pred_check_branch
      %39 = sbr.rel (0) target = $region17
    $region16: #{tpu_custom_call.1} parent=1 // pred_region
      %41 = dma.done [#allocation6], 16
    $region17: #{tpu_custom_call.1} parent=1 // pred_fallthru
      _
    %v42 = vld [vmem:[#allocation2] sm:$0xff]
    %v43 = vld [vmem:[#allocation2 + $0x8] sm:$0xff]
    %v44 = vmul.f32 %v42, %v42
    %v45 = vmul.f32 %v43, %v43
    %46 = vadd.xlane.f32.xlu0 %v44
    %v47 = vpop.xlane.xlu0 %46
    %48 = vadd.xlane.f32.xlu0 %v45
    %v49 = vpop.xlane.xlu0 %48
    %v50 = vmul.f32 %v47, 0.03125
    %v51 = vmul.f32 %v49, 0.03125
    %v52 = vadd.f32 %v50, 1e-05
    %v53 = vadd.f32 %v51, 1e-05
    %v54 = vrsqrt.pop %v52
    %v55 = vmul.f32 %v54, %v52
    %v56 = vmul.f32 %v55, %v54
    %v57 = vmul.f32 0.5, %v56
    %v58 = vsub.f32 1.5, %v57
    %v59 = vmul.f32 %v54, %v58
    %vm60 = vweird.f32 %v52
    %vm61 = vweird.f32 %v54
    %vm62 = vmor %vm60, %vm61
    %v63 = vsel %vm62, %v54, %v59
    %v64 = vrsqrt.pop %v53
    %v65 = vmul.f32 %v64, %v53
    %v66 = vmul.f32 %v65, %v64
    %v67 = vmul.f32 0.5, %v66
    %v68 = vsub.f32 1.5, %v67
    %v69 = vmul.f32 %v64, %v68
    %vm70 = vweird.f32 %v53
    %vm71 = vweird.f32 %v64
    %vm72 = vmor %vm70, %vm71
    %v73 = vsel %vm72, %v64, %v69
    %v74 = vmul.f32 %v42, %v63
    %v75 = vmul.f32 %v43, %v73
    %v76 = vld [vmem:[#allocation5] sm:$0x1]
    %v78 = vperm.slane %v76, 0
    %v80 = vmul.f32 %v74, %v78
    %v81 = vmul.f32 %v75, %v78
    %82 = vst [vmem:[#allocation7] sm:$0xff] %v80
    %83 = vst [vmem:[#allocation7 + $0x8] sm:$0xff] %v81
    // Predicated region
    $region18: #{tpu_custom_call.1} parent=1 // pred_check
      _
    $region19: #{tpu_custom_call.1} parent=1 // pred_check_branch
      %85 = sbr.rel (0) target = $region21
    $region20: #{tpu_custom_call.1} parent=1 // pred_region
      %87 = vsyncadd [#allocation4], 0
      %s88 = sshll.u32 [#allocation7], 4
      %s89 = int_to_ptr.vmem [resolvable:$true] %s88
      %s90 = sshll.u32 %s2, 4
      %s91 = int_to_ptr.hbm [resolvable:$true] %s90
      %96 = dma.vmem_to_hbm [thread:$0]  %s89, 256, %s91, [#allocation4], 128, 128, 8
    $region21: #{tpu_custom_call.1} parent=1 // pred_fallthru
      _
    // Predicated region
    $region22: #{tpu_custom_call.1} parent=1 // pred_check
      _
    $region23: #{tpu_custom_call.1} parent=1 // pred_check_branch
      %98 = sbr.rel (0) target = $region25
    $region24: #{tpu_custom_call.1} parent=1 // pred_region
      %100 = dma.done [#allocation4], 256
    $region25: #{tpu_custom_call.1} parent=1 // pred_fallthru
      _
    %101 = vsyncpa [#allocation3], 1
    %102 = vsyncpa [#allocation6], 1
    %103 = vsyncpa [#allocation4], 1

</llo_original>
